<compile_context>
chip_gen: v7x
topology: tpu7x:2x2x1
jax: 0.10.0
libtpu: 0.0.40
codegen_flags: <defaults>
</compile_context>

<pallas_src>
import jax
import jax.numpy as jnp
from jax.experimental import pallas as pl
from jax.experimental.pallas import tpu as pltpu


def _round_up(x, m):
    return ((x + m - 1) // m) * m


def _make_fm_kernel(seg_lens, pad_rows, embed_dim):
    """Builds the kernel with static per-field segment sizes baked in."""
    D = embed_dim

    def fm_kernel(idx_ref, tab_ref, bias_ref, out_ref):
        """One batch tile, batch on the lane axis.

        idx_ref : (F, Bt)          int32   segment-LOCAL per-field indices
        tab_ref : (R_pad, V_pad)   float32 rows [0:D)=emb^T, [D:2D)=(emb^2)^T, [2D]=lin^T
                                           (columns grouped per field segment, zero-padded)
        bias_ref: (1, 1)           float32 (SMEM) linear bias
        out_ref : (1, Bt)          float32 sigmoid(linear + fm interaction)
        """
        _, Bt = idx_ref.shape
        idx = idx_ref[...]                                            # (F, Bt) int32

        # Segmented one-hot: each field's vocab segment is a single compare against a
        # sublane iota (L, 1) broadcast over the lane-axis batch row.  Segments are
        # disjoint, so no accumulation is needed.
        segs = []
        for f, L in enumerate(seg_lens):                              # tiny static loop
            iota = jax.lax.broadcasted_iota(jnp.int32, (L, 1), 0)     # (L, 1)
            segs.append((iota == idx[f:f + 1, :]).astype(jnp.float32))  # (L, Bt)
        if pad_rows:
            segs.append(jnp.zeros((pad_rows, Bt), jnp.float32))
        m = jnp.concatenate(segs, axis=0)                             # (V_pad, Bt)

        # One MXU matmul yields all three field reductions (batch stays on lanes):
        #   s[0:D]  = sum_f e_f,   s[D:2D] = sum_f e_f**2,   s[2D] = sum_f w_f (linear)
        s = jnp.dot(tab_ref[...], m, preferred_element_type=jnp.float32)  # (R_pad, Bt)

        sum_e = s[:D, :]                                              # (D, Bt)
        sum_sq = s[D:2 * D, :]                                        # (D, Bt)
        lin = s[2 * D:2 * D + 1, :]                                   # (1, Bt)

        # FM pairwise interaction (reduce over embed dim = sublanes) + linear + bias.
        ix = 0.5 * jnp.sum(sum_e * sum_e - sum_sq, axis=0, keepdims=True)  # (1, Bt)
        out_ref[...] = jax.nn.sigmoid(lin + ix + bias_ref[0, 0])

    return fm_kernel


def fm_forward(x, emb_table, lin_table, lin_bias, field_dims, *, b_tile=4096):
    """x: (B, F) integer per-field indices (local, in [0, field_dims[f])).

    Returns (B,) f32 probabilities, matching the PyTorch module's forward.
    """
    B, F = x.shape
    V, D = emb_table.shape
    assert V == sum(field_dims) and F == len(field_dims)

    # ---- Per-field, sublane-aligned vocab segments ---------------------------------
    seg_lens = tuple(_round_up(d, 8) for d in field_dims)
    seg_starts = [0]
    for L in seg_lens[:-1]:
        seg_starts.append(seg_starts[-1] + L)
    V_seg = seg_starts[-1] + seg_lens[-1]
    V_pad = _round_up(V_seg, 128)            # lane-dim of the resident table
    pad_rows = V_pad - V_seg
    R = 2 * D + 1
    R_pad = _round_up(R, 8)

    # Original (offset) vocab row v  ->  padded column  seg_starts[field] + local_index
    col_map = jnp.array(
        [seg_starts[f] + v for f, d in enumerate(field_dims) for v in range(d)],
        dtype=jnp.int32)

    # Fold embeddings, squared embeddings and linear weights into one padded table.
    tab_full = jnp.concatenate(
        [emb_table.T, (emb_table * emb_table).T, lin_table.reshape(V, 1).T],
        axis=0).astype(jnp.float32)                                   # (R, V)
    tab = jnp.zeros((R_pad, V_pad), jnp.float32).at[:R, col_map].set(tab_full)

    # Segment-local indices with batch on the lane axis: (F, B).
    idx = x.astype(jnp.int32).T                                       # (F, B)

    # ---- Batch tiling on the lane axis ----------------------------------------------
    b_lanes = _round_up(B, 128)
    b_tile = min(b_tile, b_lanes)
    # v7x megacore: keep >= 2 grid steps whenever the batch spans >= 2 lane groups.
    if b_lanes >= 256 and b_tile >= b_lanes:
        b_tile = _round_up(b_lanes // 2, 128)
    b_pad = _round_up(B, b_tile)
    if b_pad != B:
        idx = jnp.pad(idx, ((0, 0), (0, b_pad - B)))   # pad with index 0 (valid row)

    kernel = _make_fm_kernel(seg_lens, pad_rows, D)

    out = pl.pallas_call(
        kernel,
        out_shape=jax.ShapeDtypeStruct((1, b_pad), jnp.float32),
        grid=(b_pad // b_tile,),
        in_specs=[
            pl.BlockSpec((F, b_tile), lambda i: (0, i)),              # index tile
            pl.BlockSpec((R_pad, V_pad), lambda i: (0, 0)),           # resident table
            pl.BlockSpec(memory_space=pltpu.MemorySpace.SMEM),        # scalar bias
        ],
        out_specs=pl.BlockSpec((1, b_tile), lambda i: (0, i)),
        compiler_params=pltpu.CompilerParams(
            dimension_semantics=("parallel",)),
    )(idx, tab, lin_bias.reshape(1, 1).astype(jnp.float32))

    return out[0, :B]                                  # torch .squeeze(1) + unpad


def _reference(x, emb_table, lin_table, lin_bias, field_dims):
    """Plain-JAX reference with the same math as the PyTorch module."""
    offsets = jnp.array(
        (0,) + tuple(jnp.cumsum(jnp.array(field_dims))[:-1].tolist()), dtype=jnp.int32)
    idx = x.astype(jnp.int32) + offsets[None, :]
    e = emb_table[idx]                                                # (B, F, D)
    lin = jnp.sum(lin_table[idx][..., 0], axis=1, keepdims=True) + lin_bias
    ix = 0.5 * jnp.sum(jnp.sum(e, 1) ** 2 - jnp.sum(e ** 2, 1), axis=1, keepdims=True)
    return jax.nn.sigmoid(lin + ix)[:, 0]


if __name__ == "__main__":
    # Model hyperparameters (small, consistent with the module's __init__).
    field_dims = (10, 20, 30, 40)
    embed_dim = 16
    batch = 8
    num_fields = len(field_dims)
    total_dim = sum(field_dims)

    key = jax.random.PRNGKey(0)
    k_emb, k_lin, k_x, k_x2 = jax.random.split(key, 4)

    # Deterministic synthetic parameters (no checkpoint).
    emb_table = 0.02 * jax.random.normal(k_emb, (total_dim, embed_dim), dtype=jnp.float32)
    lin_table = 0.02 * jax.random.normal(k_lin, (total_dim, 1), dtype=jnp.float32)
    lin_bias = jnp.zeros((1,), dtype=jnp.float32)

    # Per-field random indices in [0, field_dims[f]).
    ks = jax.random.split(k_x, num_fields)
    x = jnp.stack(
        [jax.random.randint(ks[f], (batch,), 0, field_dims[f], dtype=jnp.int32)
         for f in range(num_fields)], axis=1)          # (B, F)

    y = fm_forward(x, emb_table, lin_table, lin_bias, field_dims)
    jax.block_until_ready(y)
    y_ref = _reference(x, emb_table, lin_table, lin_bias, field_dims)
    assert y.shape == (batch,)
    assert jnp.allclose(y, y_ref, atol=1e-5, rtol=1e-5)

    # Second check: non-multiple-of-128 batch exercising the multi-tile (grid>1) path.
    batch2 = 200
    ks2 = jax.random.split(k_x2, num_fields)
    x2 = jnp.stack(
        [jax.random.randint(ks2[f], (batch2,), 0, field_dims[f], dtype=jnp.int32)
         for f in range(num_fields)], axis=1)
    y2 = fm_forward(x2, emb_table, lin_table, lin_bias, field_dims)
    jax.block_until_ready(y2)
    y2_ref = _reference(x2, emb_table, lin_table, lin_bias, field_dims)
    assert y2.shape == (batch2,)
    assert jnp.allclose(y2, y2_ref, atol=1e-5, rtol=1e-5)

    print("KERNEL_OK")
</pallas_src>

<mosaic_0001>
module attributes {stable_mosaic.version = 11 : i64} {
  func.func @fm_kernel(%arg0: i32, %arg1: memref<4x128xi32, #tpu.memory_space<vmem>>, %arg2: memref<40x128xf32, #tpu.memory_space<vmem>>, %arg3: memref<1x1xf32, #tpu.memory_space<smem>>, %arg4: memref<1x128xf32, #tpu.memory_space<vmem>>) attributes {dimension_semantics = [#tpu.dimension_semantics<parallel>], iteration_bounds = array<i64: 1>, scalar_prefetch = 0 : i64, scratch_operands = 0 : i64, tpu.core_type = #tpu.core_type<tc>, window_params = [{transform_indices = @transform_0, window_bounds = array<i64: 4, 128>}, {pipeline_mode = #tpu.pipeline_mode<synchronous>, transform_indices = @transform_1, window_bounds = array<i64: 40, 128>}, {transform_indices = @transform_2, window_bounds = array<i64: 1, 1>}, {transform_indices = @transform_3, window_bounds = array<i64: 1, 128>}]} {
    %c0 = arith.constant 0 : index
    %c0_0 = arith.constant 0 : index
    %0 = vector.load %arg1[%c0, %c0_0] : memref<4x128xi32, #tpu.memory_space<vmem>>, vector<4x128xi32>
    %1 = tpu.iota {dimensions = array<i32: 0>} : vector<16x1xi32>
    %2 = vector.extract_strided_slice %0 {offsets = [0, 0], sizes = [1, 128], strides = [1, 1]} : vector<4x128xi32> to vector<1x128xi32>
    %3 = vector.broadcast %1 : vector<16x1xi32> to vector<16x128xi32>
    %4 = vector.broadcast %2 : vector<1x128xi32> to vector<16x128xi32>
    %5 = arith.cmpi eq, %3, %4 : vector<16x128xi32>
    %6 = arith.extui %5 : vector<16x128xi1> to vector<16x128xi32>
    %7 = arith.sitofp %6 : vector<16x128xi32> to vector<16x128xf32>
    %8 = tpu.iota {dimensions = array<i32: 0>} : vector<24x1xi32>
    %9 = vector.extract_strided_slice %0 {offsets = [1, 0], sizes = [1, 128], strides = [1, 1]} : vector<4x128xi32> to vector<1x128xi32>
    %10 = vector.broadcast %8 : vector<24x1xi32> to vector<24x128xi32>
    %11 = vector.broadcast %9 : vector<1x128xi32> to vector<24x128xi32>
    %12 = arith.cmpi eq, %10, %11 : vector<24x128xi32>
    %13 = arith.extui %12 : vector<24x128xi1> to vector<24x128xi32>
    %14 = arith.sitofp %13 : vector<24x128xi32> to vector<24x128xf32>
    %15 = tpu.iota {dimensions = array<i32: 0>} : vector<32x1xi32>
    %16 = vector.extract_strided_slice %0 {offsets = [2, 0], sizes = [1, 128], strides = [1, 1]} : vector<4x128xi32> to vector<1x128xi32>
    %17 = vector.broadcast %15 : vector<32x1xi32> to vector<32x128xi32>
    %18 = vector.broadcast %16 : vector<1x128xi32> to vector<32x128xi32>
    %19 = arith.cmpi eq, %17, %18 : vector<32x128xi32>
    %20 = arith.extui %19 : vector<32x128xi1> to vector<32x128xi32>
    %21 = arith.sitofp %20 : vector<32x128xi32> to vector<32x128xf32>
    %22 = tpu.iota {dimensions = array<i32: 0>} : vector<40x1xi32>
    %23 = vector.extract_strided_slice %0 {offsets = [3, 0], sizes = [1, 128], strides = [1, 1]} : vector<4x128xi32> to vector<1x128xi32>
    %24 = vector.broadcast %22 : vector<40x1xi32> to vector<40x128xi32>
    %25 = vector.broadcast %23 : vector<1x128xi32> to vector<40x128xi32>
    %26 = arith.cmpi eq, %24, %25 : vector<40x128xi32>
    %27 = arith.extui %26 : vector<40x128xi1> to vector<40x128xi32>
    %28 = arith.sitofp %27 : vector<40x128xi32> to vector<40x128xf32>
    %cst = arith.constant 0.000000e+00 : f32
    %29 = vector.broadcast %cst : f32 to vector<16x128xf32>
    %30 = tpu.concatenate %7, %14, %21, %28, %29 in 0 : vector<16x128xf32>, vector<24x128xf32>, vector<32x128xf32>, vector<40x128xf32>, vector<16x128xf32> -> vector<128x128xf32>
    %c0_1 = arith.constant 0 : index
    %c0_2 = arith.constant 0 : index
    %31 = vector.load %arg2[%c0_1, %c0_2] : memref<40x128xf32, #tpu.memory_space<vmem>>, vector<40x128xf32>
    %cst_3 = arith.constant dense<0.000000e+00> : vector<40x128xf32>
    %32 = tpu.matmul %31, %30, %cst_3 {dimension_numbers = #tpu.dot_dimension_numbers<[1], [0], [0], [1], [0, 0, 1, 1], [], []>} : vector<40x128xf32>, vector<128x128xf32>, vector<40x128xf32> -> vector<40x128xf32>
    %33 = vector.extract_strided_slice %32 {offsets = [0, 0], sizes = [16, 128], strides = [1, 1]} : vector<40x128xf32> to vector<16x128xf32>
    %34 = vector.extract_strided_slice %32 {offsets = [16, 0], sizes = [16, 128], strides = [1, 1]} : vector<40x128xf32> to vector<16x128xf32>
    %35 = vector.extract_strided_slice %32 {offsets = [32, 0], sizes = [1, 128], strides = [1, 1]} : vector<40x128xf32> to vector<1x128xf32>
    %36 = arith.mulf %33, %33 : vector<16x128xf32>
    %37 = arith.subf %36, %34 : vector<16x128xf32>
    %cst_4 = arith.constant dense<0.000000e+00> : vector<128xf32>
    %38 = vector.multi_reduction <add>, %37, %cst_4 [0] : vector<16x128xf32> to vector<128xf32>
    %39 = vector.shape_cast %38 : vector<128xf32> to vector<1x128xf32>
    %cst_5 = arith.constant 5.000000e-01 : f32
    %40 = vector.broadcast %cst_5 : f32 to vector<1x128xf32>
    %41 = arith.mulf %40, %39 : vector<1x128xf32>
    %42 = arith.addf %35, %41 : vector<1x128xf32>
    %c0_6 = arith.constant 0 : index
    %c0_7 = arith.constant 0 : index
    %43 = memref.load %arg3[%c0_6, %c0_7] : memref<1x1xf32, #tpu.memory_space<smem>>
    %44 = vector.broadcast %43 : f32 to vector<1x128xf32>
    %45 = arith.addf %42, %44 : vector<1x128xf32>
    %46 = arith.negf %45 : vector<1x128xf32>
    %47 = math.exp %46 : vector<1x128xf32>
    %cst_8 = arith.constant 1.000000e+00 : f32
    %48 = vector.broadcast %cst_8 : f32 to vector<1x128xf32>
    %49 = arith.addf %48, %47 : vector<1x128xf32>
    %50 = arith.divf %48, %49 : vector<1x128xf32>
    %c0_9 = arith.constant 0 : index
    %c0_10 = arith.constant 0 : index
    %51 = vector.load %arg4[%c0_9, %c0_10] : memref<1x128xf32, #tpu.memory_space<vmem>>, vector<1x128xf32>
    tpu.vector_store %arg4[%c0_9, %c0_10], %50 {strides = array<i32>} : memref<1x128xf32, #tpu.memory_space<vmem>>, vector<1x128xf32>,
    return
  }
  func.func @transform_0(%arg0: i32) -> (i32, i32) {
    %c0_i32 = arith.constant 0 : i32
    %c0_i32_0 = arith.constant 0 : i32
    return %c0_i32, %arg0 : i32, i32
  }
  func.func @transform_1(%arg0: i32) -> (i32, i32) {
    %c0_i32 = arith.constant 0 : i32
    %c0_i32_0 = arith.constant 0 : i32
    %c0_i32_1 = arith.constant 0 : i32
    return %c0_i32, %c0_i32_0 : i32, i32
  }
  func.func @transform_2(%arg0: i32) -> (i32, i32) {
    %c0_i32 = arith.constant 0 : i32
    %c0_i32_0 = arith.constant 0 : i32
    %c0_i32_1 = arith.constant 0 : i32
    return %c0_i32, %c0_i32_0 : i32, i32
  }
  func.func @transform_3(%arg0: i32) -> (i32, i32) {
    %c0_i32 = arith.constant 0 : i32
    %c0_i32_0 = arith.constant 0 : i32
    return %c0_i32, %arg0 : i32, i32
  }
}

</mosaic_0001>

<llo_original>
// kernel: tpu_custom_call.1
$region0: #{tpu_custom_call.1}
  #allocation0 [shape = 'u32[]', space=smem, size = 0x4, offset = 0x4, fixed_abs, tag = 'smem constant byte address 0x4 - core index']
  #allocation1 [shape = 'u32[144,128]{1,0:T(1,128)}', space=vmem, size = 0x12000, scoped, tag = 'internal scratch']
  #allocation2 [shape = 'f32[1,1]{1,0:T(1,128)S(6)}', space=smem, size = 0x200, scoped, tag = 'scoped memory for tpu_custom_call.1']
  %s0 = inlined_call_operand.hbm [shape: s32[4,128], index: 0, kind: input, shape index: {}]
  %s1 = inlined_call_operand.hbm [shape: f32[40,128], index: 1, kind: input, shape index: {}]
  %s2 = inlined_call_operand.<no memory space> [shape: f32[1,1], index: 2, kind: input, shape index: {}]
  %s3 = inlined_call_operand.hbm [shape: f32[1,128], index: 3, kind: output, shape index: {}]
  %s4 = sld [smem:[#allocation0]]
  $region30: #{tpu_custom_call.1} parent=0
    _
  %s6 = ssub.s32 1, %s4
  %s7 = scalar_select 0, %s6, %s4
  %8 = sst [smem:[#allocation2]] %s2
  $region1: #{tpu_custom_call.1} parent=0
    #allocation3 [shape = 'u8[2048]{0}', space=vmem, size = 0x800, scoped, tag = 'input window, operand 0, single buffered']
    #allocation4 [shape = 's32[1]{0}', space=sflag, size = 0x4, scoped, tag = 'scoped memory for tpu_custom_call.1']
    #allocation5 [shape = 's32[1]{0}', space=sflag, size = 0x4, scoped, tag = 'scoped memory for tpu_custom_call.1']
    #allocation6 [shape = 'u8[20480]{0}', space=vmem, size = 0x5000, scoped, tag = 'input window, operand 1, single buffered']
    #allocation7 [shape = 's32[1]{0}', space=sflag, size = 0x4, scoped, tag = 'scoped memory for tpu_custom_call.1']
    #allocation8 [shape = 'u8[512]{0}', space=vmem, size = 0x400, scoped, tag = 'output window, operand 0, single buffered']
    %9 = vsyncpa [#allocation4], 0
    %10 = vsyncpa [#allocation7], 0
    %11 = vsyncpa [#allocation5], 0
    // Predicated region
    $region2: #{tpu_custom_call.1} parent=1 // pred_check
      _
    $region3: #{tpu_custom_call.1} parent=1 // pred_check_branch
      %13 = sbr.rel (0) target = $region5
    $region4: #{tpu_custom_call.1} parent=1 // pred_region
      %s15 = ssub.s32 64, 64
      %16 = vsyncadd [#allocation4], %s15
      %s18 = sshll.u32 [#allocation3], 4
      %s19 = int_to_ptr.vmem [resolvable:$true] %s18
      %21 = dma.hbm_to_vmem [thread:$0]  %s0, 64, %s19, [#allocation4]
    $region5: #{tpu_custom_call.1} parent=1 // pred_fallthru
      _
    // Predicated region
    $region6: #{tpu_custom_call.1} parent=1 // pred_check
      _
    $region7: #{tpu_custom_call.1} parent=1 // pred_check_branch
      %23 = sbr.rel (0) target = $region9
    $region8: #{tpu_custom_call.1} parent=1 // pred_region
      %s25 = ssub.s32 640, 640
      %26 = vsyncadd [#allocation7], %s25
      %s27 = sshll.u32 [#allocation6], 4
      %s28 = int_to_ptr.vmem [resolvable:$true] %s27
      %33 = dma.hbm_to_vmem [thread:$0]  %s1, 640, %s28, [#allocation7], 128, 128, 8
    $region9: #{tpu_custom_call.1} parent=1 // pred_fallthru
      _
    // Predicated region
    $region10: #{tpu_custom_call.1} parent=1 // pred_check
      _
    $region11: #{tpu_custom_call.1} parent=1 // pred_check_branch
      %35 = sbr.rel (0) target = $region13
    $region12: #{tpu_custom_call.1} parent=1 // pred_region
      _
    $region13: #{tpu_custom_call.1} parent=1 // pred_fallthru
      _
    // Predicated region
    $region14: #{tpu_custom_call.1} parent=1 // pred_check
      _
    $region15: #{tpu_custom_call.1} parent=1 // pred_check_branch
      %37 = sbr.rel (0) target = $region17
    $region16: #{tpu_custom_call.1} parent=1 // pred_region
      %38 = dma.done [#allocation4], 64
    $region17: #{tpu_custom_call.1} parent=1 // pred_fallthru
      _
    // Predicated region
    $region18: #{tpu_custom_call.1} parent=1 // pred_check
      _
    $region19: #{tpu_custom_call.1} parent=1 // pred_check_branch
      %40 = sbr.rel (0) target = $region21
    $region20: #{tpu_custom_call.1} parent=1 // pred_region
      %41 = dma.done [#allocation7], 640
    $region21: #{tpu_custom_call.1} parent=1 // pred_fallthru
      _
    %v42 = vld [vmem:[#allocation3] sm:$0xf]
    %v43 = vlaneseq
    %v44 = vshrl.u32 %v43, 7
    %v45 = vadd.s32 %v44, 8
    %v46 = vlaneseq
    %v47 = vshrl.u32 %v46, 7
    %v48 = vsub.s32 0, %v47
    %v49 = vrot.slane %v42, %v48
    %vm50 = vcmp.eq.s32.totalorder %v44, %v49
    %vm51 = vcmp.eq.s32.totalorder %v45, %v49
    %v52 = vsel %vm50, 1, 0
    %v53 = vsel %vm51, 1, 0
    %v54 = vcvt.s32.f32 %v52
    %v55 = vcvt.s32.f32 %v53
    %v56 = vadd.s32 %v44, 16
    %v57 = vlaneseq
    %v58 = vshrl.u32 %v57, 7
    %v59 = vsub.s32 1, %v58
    %v60 = vrot.slane %v42, %v59
    %vm61 = vcmp.eq.s32.totalorder %v44, %v60
    %vm62 = vcmp.eq.s32.totalorder %v45, %v60
    %vm63 = vcmp.eq.s32.totalorder %v56, %v60
    %v64 = vsel %vm61, 1, 0
    %v65 = vsel %vm62, 1, 0
    %v66 = vsel %vm63, 1, 0
    %v67 = vcvt.s32.f32 %v64
    %v68 = vcvt.s32.f32 %v65
    %v69 = vcvt.s32.f32 %v66
    %v70 = vadd.s32 %v44, 24
    %v71 = vlaneseq
    %v72 = vshrl.u32 %v71, 7
    %v73 = vsub.s32 2, %v72
    %v74 = vrot.slane %v42, %v73
    %vm75 = vcmp.eq.s32.totalorder %v44, %v74
    %vm76 = vcmp.eq.s32.totalorder %v45, %v74
    %vm77 = vcmp.eq.s32.totalorder %v56, %v74
    %vm78 = vcmp.eq.s32.totalorder %v70, %v74
    %v79 = vsel %vm75, 1, 0
    %v80 = vsel %vm76, 1, 0
    %v81 = vsel %vm77, 1, 0
    %v82 = vsel %vm78, 1, 0
    %v83 = vcvt.s32.f32 %v79
    %v84 = vcvt.s32.f32 %v80
    %v85 = vcvt.s32.f32 %v81
    %v86 = vcvt.s32.f32 %v82
    %v87 = vadd.s32 %v44, 32
    %v88 = vlaneseq
    %v89 = vshrl.u32 %v88, 7
    %v90 = vsub.s32 3, %v89
    %v91 = vrot.slane %v42, %v90
    %vm92 = vcmp.eq.s32.totalorder %v44, %v91
    %vm93 = vcmp.eq.s32.totalorder %v45, %v91
    %vm94 = vcmp.eq.s32.totalorder %v56, %v91
    %vm95 = vcmp.eq.s32.totalorder %v70, %v91
    %vm96 = vcmp.eq.s32.totalorder %v87, %v91
    %v97 = vsel %vm92, 1, 0
    %v98 = vsel %vm93, 1, 0
    %v99 = vsel %vm94, 1, 0
    %v100 = vsel %vm95, 1, 0
    %v101 = vsel %vm96, 1, 0
    %v102 = vcvt.s32.f32 %v97
    %v103 = vcvt.s32.f32 %v98
    %v104 = vcvt.s32.f32 %v99
    %v105 = vcvt.s32.f32 %v100
    %v106 = vcvt.s32.f32 %v101
    %v107 = vld [vmem:[#allocation6] sm:$0xff]
    %v108 = vld [vmem:[#allocation6 + $0x8] sm:$0xff]
    %v109 = vld [vmem:[#allocation6 + $0x10] sm:$0xff]
    %v110 = vld [vmem:[#allocation6 + $0x18] sm:$0xff]
    %v111 = vld [vmem:[#allocation6 + $0x20] sm:$0xff]
    %112 = vmatprep.subr.mxu0 0.0
    %113 = vmatpush1.msra.mxu0 %v54
    %114 = vmatprep.subr.mxu0 0.0
    %115 = vmatpush1.msra.mxu0 %v55
    %116 = vmatprep.subr.mxu0 0.0
    %117 = vmatpush1.msra.mxu0 %v67
    %118 = vmatprep.subr.mxu0 0.0
    %119 = vmatpush1.msra.mxu0 %v68
    %120 = vmatprep.subr.mxu0 0.0
    %121 = vmatpush1.msra.mxu0 %v69
    %122 = vmatprep.subr.mxu0 0.0
    %123 = vmatpush1.msra.mxu0 %v83
    %124 = vmatprep.subr.mxu0 0.0
    %125 = vmatpush1.msra.mxu0 %v84
    %126 = vmatprep.subr.mxu0 0.0
    %127 = vmatpush1.msra.mxu0 %v85
    %128 = vmatprep.subr.mxu0 0.0
    %129 = vmatpush1.msra.mxu0 %v86
    %130 = vmatprep.subr.mxu0 0.0
    %131 = vmatpush1.msra.mxu0 %v102
    %132 = vmatprep.subr.mxu0 0.0
    %133 = vmatpush1.msra.mxu0 %v103
    %134 = vmatprep.subr.mxu0 0.0
    %135 = vmatpush1.msra.mxu0 %v104
    %136 = vmatprep.subr.mxu0 0.0
    %137 = vmatpush1.msra.mxu0 %v105
    %138 = vmatprep.subr.mxu0 0.0
    %139 = vmatpush1.msra.mxu0 %v106
    %140 = vmatprep.subr.mxu0 0.0
    %141 = vmatpush1.msra.mxu0 0.0
    %142 = vmatprep.subr.mxu0 0.0
    %143 = vmatpush1.msra.mxu0 0.0
    %144 = vmatprep.subr.mxu0 0.0
    %145 = vmatpush1.msra.mxu0 0.0
    %146 = vmatprep.subr.mxu0 0.0
    %147 = vmatpush1.msra.mxu0 0.0
    %148 = vmatprep.subr.mxu0 0.0
    %149 = vmatpush1.msra.mxu0 0.0
    %150 = vmatprep.subr.mxu0 0.0
    %151 = vmatpush1.msra.mxu0 0.0
    %152 = vmatprep.subr.mxu0 0.0
    %153 = vmatpush1.msra.mxu0 0.0
    %154 = vmatprep.subr.mxu0 0.0
    %155 = vmatpush1.msra.mxu0 0.0
    %156 = vmatprep.subr.mxu0 0.0
    %157 = vmatpush1.msra.mxu0 0.0
    %158 = vmatprep.subr.mxu0 0.0
    %159 = vmatpush1.msra.mxu0 0.0
    %160 = vmatprep.subr.mxu0 0.0
    %161 = vmatpush1.msra.mxu0 0.0
    %162 = vmatprep.subr.mxu0 0.0
    %163 = vmatpush1.msra.mxu0 0.0
    %164 = vmatprep.subr.mxu0 0.0
    %165 = vmatpush1.msra.mxu0 0.0
    %166 = vmatprep.subr.mxu0 0.0
    %167 = vmatpush1.msra.mxu0 0.0
    %168 = vmatprep.subr.mxu0 0.0
    %169 = vmatpush1.msra.mxu0 0.0
    %170 = vmatprep.subr.mxu0 0.0
    %171 = vmatpush1.msra.mxu0 0.0
    %172 = vmatprep.subr.mxu0 0.0
    %173 = vmatpush1.msra.mxu0 0.0
    %174 = vmatprep.subr.mxu0 0.0
    %175 = vmatpush1.msra.mxu0 0.0
    %176 = vmatprep.mubr.f32.mxu0 0.0
    %177 = vmatmul.mubr.f32.gmra.mrb[0].mxu0 %v107
    %v178 = vpop.f32.mrb[0].mxu0
    %v179 = vadd.f32 0.0, %v178
    %v180 = vpop.f32.mrb[0].mxu0
    %181 = vmatprep.mubr.f32.mxu0 0.0
    %182 = vmatmul.mubr.f32.gmra.mrb[0].mxu0 %v108
    %v183 = vpop.f32.mrb[0].mxu0
    %v184 = vadd.f32 0.0, %v183
    %v185 = vpop.f32.mrb[0].mxu0
    %186 = vmatprep.mubr.f32.mxu0 0.0
    %187 = vmatmul.mubr.f32.gmra.mrb[0].mxu0 %v109
    %v188 = vpop.f32.mrb[0].mxu0
    %v189 = vadd.f32 0.0, %v188
    %v190 = vpop.f32.mrb[0].mxu0
    %191 = vmatprep.mubr.f32.mxu0 0.0
    %192 = vmatmul.mubr.f32.gmra.mrb[0].mxu0 %v110
    %v193 = vpop.f32.mrb[0].mxu0
    %v194 = vadd.f32 0.0, %v193
    %v195 = vpop.f32.mrb[0].mxu0
    %196 = vmatprep.mubr.f32.mxu0 0.0
    %197 = vmatmul.mubr.f32.gmra.mrb[0].mxu0 %v111
    %v198 = vpop.f32.mrb[0].mxu0
    %v199 = vadd.f32 0.0, %v198
    %v200 = vpop.f32.mrb[0].mxu0
    %201 = vdwg.mxu0
    %v202 = vmul.f32 %v179, %v179
    %v203 = vmul.f32 %v184, %v184
    %v204 = vsub.f32 %v202, %v189
    %v205 = vsub.f32 %v203, %v194
    %v206 = vadd.f32 %v204, %v205
    %v207 = vrot.slane %v206, 4
    %v208 = vadd.f32 %v206, %v207
    %v209 = vrot.slane %v208, 2
    %v210 = vadd.f32 %v208, %v209
    %v211 = vrot.slane %v210, 1
    %v212 = vadd.f32 %v210, %v211
    %v213 = vmul.f32 %v212, 0.5
    %v214 = vadd.f32 %v199, %v213
    %s215 = sld [smem:[#allocation2]]
    %v216 = vstv %s215
    %v217 = vadd.f32 %v214, %v216
    %v218 = vxor.u32 %v217, 2147483648
    %v219 = vmul.f32 %v218, 1.442695
    %v220 = vpow.pop %v219
    %v221 = vadd.f32 %v220, 1.0
    %v222 = vrcp.pop %v221
    %v223 = vmul.f32 1.0, %v222
    %224 = vst [vmem:[#allocation8] sm:$0x1] %v223
    // Predicated region
    $region22: #{tpu_custom_call.1} parent=1 // pred_check
      _
    $region23: #{tpu_custom_call.1} parent=1 // pred_check_branch
      %226 = sbr.rel (0) target = $region25
    $region24: #{tpu_custom_call.1} parent=1 // pred_region
      %s228 = ssub.s32 16, 16
      %229 = vsyncadd [#allocation5], %s228
      %s231 = sshll.u32 [#allocation8], 4
      %s232 = int_to_ptr.vmem [resolvable:$true] %s231
      %234 = dma.vmem_to_hbm [thread:$0]  %s232, 16, %s3, [#allocation5]
    $region25: #{tpu_custom_call.1} parent=1 // pred_fallthru
      _
    // Predicated region
    $region26: #{tpu_custom_call.1} parent=1 // pred_check
      _
    $region27: #{tpu_custom_call.1} parent=1 // pred_check_branch
      %236 = sbr.rel (0) target = $region29
    $region28: #{tpu_custom_call.1} parent=1 // pred_region
      %237 = dma.done [#allocation5], 16
    $region29: #{tpu_custom_call.1} parent=1 // pred_fallthru
      _
    %238 = vsyncpa [#allocation4], 1
    %239 = vsyncpa [#allocation7], 1
    %240 = vsyncpa [#allocation5], 1

</llo_original>
